<compile_context>
chip_gen: v7x
topology: tpu7x:2x2x1
jax: 0.10.0
libtpu: 0.0.40
codegen_flags: <defaults>
</compile_context>

<pallas_src>
import jax
import jax.numpy as jnp
from jax import lax
from jax.experimental import pallas as pl
from jax.experimental.pallas import tpu as pltpu

NUM_BLOCKS = 3


def _make_rlfb_kernel(C, H, W, num_blocks):
    HW = H * W
    # (lane shift, kx) for each 3x3 tap, (ky, kx) row-major, in the unpadded
    # flat layout: output position p reads feature position p + d.
    taps = [((ky - 1) * W + (kx - 1), kx) for ky in range(3) for kx in range(3)]

    def kernel(x_ref, w_ref, b_ref, o_ref, patches_ref):
        # x_ref:       (1, C, HW) f32
        # w_ref:       (num_blocks, C, 9C) bf16 im2col weights
        # b_ref:       (num_blocks, C, 1) f32 bias
        # o_ref:       (1, C, HW) f32 output
        # patches_ref: (9C, HW) f32 scratch (im2col buffer)

        # Zero the im2col buffer once: lanes outside each tap's (static) write
        # range -- the vertical out-of-bounds taps -- are identical every
        # layer, so they only need to be zeroed here.
        patches_ref[...] = jnp.zeros_like(patches_ref)

        # Horizontal wrap masks, indexed by the *destination* (output) column.
        # Built once per grid step; applied only to the 6 taps with kx != 1.
        col = lax.broadcasted_iota(jnp.int32, (1, HW), 1) % W
        left_keep = (col != 0).astype(jnp.float32)        # taps with kx-1 == -1
        right_keep = (col != W - 1).astype(jnp.float32)   # taps with kx-1 == +1

        x = x_ref[0]                                      # (C, HW) f32
        feat = x
        for l in range(num_blocks):                       # static unroll
            # im2col scatter: each tap is a static lane shift of the feature.
            for t, (d, kx) in enumerate(taps):
                a, b = max(0, -d), HW - max(0, d)
                v = feat[:, a + d:b + d]
                if kx == 0:
                    v = v * left_keep[:, a:b]
                elif kx == 2:
                    v = v * right_keep[:, a:b]
                patches_ref[t * C:(t + 1) * C, a:b] = v
            # One MXU matmul per layer: bf16 operands, f32 accumulation.
            acc = jnp.dot(w_ref[l],
                          patches_ref[...].astype(jnp.bfloat16),
                          preferred_element_type=jnp.float32)    # (C, HW)
            feat = jnp.maximum(acc + b_ref[l], 0.0)
        o_ref[0] = (feat + x).astype(o_ref.dtype)         # residual add

    return kernel


@jax.jit
def rlfb_forward(x_nchw, w_flat, b_flat):
    """RLFB forward: x + Sequential(num_blocks x [conv3x3(pad=1), ReLU])(x)."""
    N, C, H, W = x_nchw.shape
    num_blocks = w_flat.shape[0]
    HW = H * W
    K = 9 * C

    # Pure reshape (contiguous): flat spatial dim goes on the lane axis.
    x_flat = x_nchw.reshape(N, C, HW)

    kernel = _make_rlfb_kernel(C, H, W, num_blocks)
    y = pl.pallas_call(
        kernel,
        out_shape=jax.ShapeDtypeStruct((N, C, HW), jnp.float32),
        grid=(N,),
        in_specs=[
            pl.BlockSpec((1, C, HW), lambda n: (n, 0, 0)),
            # Constant block index -> weights/bias stay resident across steps.
            pl.BlockSpec((num_blocks, C, K), lambda n: (0, 0, 0)),
            pl.BlockSpec((num_blocks, C, 1), lambda n: (0, 0, 0)),
        ],
        out_specs=pl.BlockSpec((1, C, HW), lambda n: (n, 0, 0)),
        scratch_shapes=[pltpu.VMEM((K, HW), jnp.float32)],
        compiler_params=pltpu.CompilerParams(
            dimension_semantics=("parallel",)),
    )(x_flat, w_flat, b_flat)

    return y.reshape(N, C, H, W)


def init_rlfb_params(key, in_channels, num_blocks=NUM_BLOCKS):
    """PyTorch-style Conv2d init: uniform(+-1/sqrt(fan_in)), OIHW weights."""
    params = []
    for _ in range(num_blocks):
        key, wk, bk = jax.random.split(key, 3)
        scale = 1.0 / jnp.sqrt(jnp.float32(in_channels * 9))
        w = jax.random.uniform(wk, (in_channels, in_channels, 3, 3),
                               jnp.float32, -scale, scale)
        b = jax.random.uniform(bk, (in_channels,), jnp.float32, -scale, scale)
        params.append((w, b))
    return params


def pack_rlfb_params(params):
    """OIHW weights -> (L, Cout, 9*Cin) bf16 im2col weights, (L, Cout, 1) bias.

    The 9*Cin axis is ordered tap-major ((ky,kx) row-major), channel-minor, to
    match the kernel's im2col buffer row layout.
    """
    w_flat = jnp.stack([jnp.transpose(w, (0, 2, 3, 1)).reshape(w.shape[0], -1)
                        for (w, _) in params])
    b_flat = jnp.stack([b for (_, b) in params])[:, :, None]
    return w_flat.astype(jnp.bfloat16), b_flat.astype(jnp.float32)


def rlfb_forward_ref(x_nchw, params):
    """Pure-JAX f32 reference for correctness checking."""
    y = x_nchw
    for (w, b) in params:
        y = lax.conv_general_dilated(
            y, w, window_strides=(1, 1), padding=((1, 1), (1, 1)),
            dimension_numbers=("NCHW", "OIHW", "NCHW"),
            precision=lax.Precision.HIGHEST)
        y = jnp.maximum(y + b[None, :, None, None], 0.0)
    return y + x_nchw


if __name__ == "__main__":
    key = jax.random.PRNGKey(0)
    kx, kp = jax.random.split(key)

    N, C, H, W = 2, 4, 16, 16
    x = jax.random.normal(kx, (N, C, H, W), jnp.float32)
    params = init_rlfb_params(kp, C)
    w_flat, b_flat = pack_rlfb_params(params)

    y = rlfb_forward(x, w_flat, b_flat)
    y = jax.block_until_ready(y)
    assert y.shape == (N, C, H, W), y.shape

    y_ref = rlfb_forward_ref(x, params)
    rel_err = jnp.max(jnp.abs(y - y_ref)) / (jnp.max(jnp.abs(y_ref)) + 1e-6)
    assert float(rel_err) < 5e-2, f"relative error too large: {float(rel_err)}"

    print("KERNEL_OK")
</pallas_src>

<mosaic_0001>
module attributes {stable_mosaic.version = 11 : i64} {
  func.func @kernel(%arg0: i32, %arg1: memref<1x4x256xf32, #tpu.memory_space<vmem>>, %arg2: memref<3x4x36xbf16, #tpu.memory_space<vmem>>, %arg3: memref<3x4x1xf32, #tpu.memory_space<vmem>>, %arg4: memref<1x4x256xf32, #tpu.memory_space<vmem>>, %arg5: memref<36x256xf32, #tpu.memory_space<vmem>>) attributes {dimension_semantics = [#tpu.dimension_semantics<parallel>], iteration_bounds = array<i64: 2>, scalar_prefetch = 0 : i64, scratch_operands = 1 : i64, tpu.core_type = #tpu.core_type<tc>, window_params = [{transform_indices = @transform_0, window_bounds = array<i64: 1, 4, 256>}, {pipeline_mode = #tpu.pipeline_mode<synchronous>, transform_indices = @transform_1, window_bounds = array<i64: 3, 4, 36>}, {pipeline_mode = #tpu.pipeline_mode<synchronous>, transform_indices = @transform_2, window_bounds = array<i64: 3, 4, 1>}, {transform_indices = @transform_3, window_bounds = array<i64: 1, 4, 256>}]} {
    %cst = arith.constant 0.000000e+00 : f32
    %0 = vector.broadcast %cst : f32 to vector<36x256xf32>
    %c0 = arith.constant 0 : index
    %c0_0 = arith.constant 0 : index
    %1 = vector.load %arg5[%c0, %c0_0] : memref<36x256xf32, #tpu.memory_space<vmem>>, vector<36x256xf32>
    tpu.vector_store %arg5[%c0, %c0_0], %0 {strides = array<i32>} : memref<36x256xf32, #tpu.memory_space<vmem>>, vector<36x256xf32>,
    %2 = tpu.iota {dimensions = array<i32: 1>} : vector<1x256xi32>
    %c16_i32 = arith.constant 16 : i32
    %c0_i32 = arith.constant 0 : i32
    %3 = arith.cmpi eq, %c16_i32, %c0_i32 : i32
    %c1_i32 = arith.constant 1 : i32
    %4 = arith.select %3, %c1_i32, %c16_i32 : i32
    %5 = vector.broadcast %4 : i32 to vector<1x256xi32>
    %6 = arith.remsi %2, %5 : vector<1x256xi32>
    %c0_i32_1 = arith.constant 0 : i32
    %7 = vector.broadcast %c0_i32_1 : i32 to vector<1x256xi32>
    %8 = arith.cmpi ne, %6, %7 : vector<1x256xi32>
    %c0_i32_2 = arith.constant 0 : i32
    %9 = vector.broadcast %c0_i32_2 : i32 to vector<1x256xi32>
    %10 = arith.cmpi slt, %6, %9 : vector<1x256xi32>
    %c0_i32_3 = arith.constant 0 : i32
    %11 = arith.cmpi slt, %4, %c0_i32_3 : i32
    %12 = vector.broadcast %11 : i1 to vector<1x256xi1>
    %13 = vector.broadcast %12 : vector<1x256xi1> to vector<1x256xi1>
    %14 = arith.xori %10, %13 : vector<1x256xi1>
    %15 = arith.andi %14, %8 : vector<1x256xi1>
    %16 = vector.broadcast %4 : i32 to vector<1x256xi32>
    %17 = arith.addi %6, %16 : vector<1x256xi32>
    %18 = arith.select %15, %17, %6 : vector<1x256xi1>, vector<1x256xi32>
    %c0_i32_4 = arith.constant 0 : i32
    %19 = vector.broadcast %c0_i32_4 : i32 to vector<1x256xi32>
    %20 = arith.cmpi ne, %18, %19 : vector<1x256xi32>
    %21 = arith.extui %20 : vector<1x256xi1> to vector<1x256xi32>
    %22 = arith.sitofp %21 : vector<1x256xi32> to vector<1x256xf32>
    %c15_i32 = arith.constant 15 : i32
    %23 = vector.broadcast %c15_i32 : i32 to vector<1x256xi32>
    %24 = arith.cmpi ne, %18, %23 : vector<1x256xi32>
    %25 = arith.extui %24 : vector<1x256xi1> to vector<1x256xi32>
    %26 = arith.sitofp %25 : vector<1x256xi32> to vector<1x256xf32>
    %c0_5 = arith.constant 0 : index
    %c0_6 = arith.constant 0 : index
    %c0_7 = arith.constant 0 : index
    %27 = vector.load %arg1[%c0_5, %c0_6, %c0_7] : memref<1x4x256xf32, #tpu.memory_space<vmem>>, vector<1x4x256xf32>
    %28 = vector.shape_cast %27 : vector<1x4x256xf32> to vector<4x256xf32>
    %29 = vector.extract_strided_slice %28 {offsets = [0, 0], sizes = [4, 239], strides = [1, 1]} : vector<4x256xf32> to vector<4x239xf32>
    %30 = vector.extract_strided_slice %22 {offsets = [0, 17], sizes = [1, 239], strides = [1, 1]} : vector<1x256xf32> to vector<1x239xf32>
    %31 = vector.broadcast %30 : vector<1x239xf32> to vector<4x239xf32>
    %32 = arith.mulf %29, %31 : vector<4x239xf32>
    %c0_8 = arith.constant 0 : index
    %c17 = arith.constant 17 : index
    %33 = vector.load %arg5[%c0_8, %c17] : memref<36x256xf32, #tpu.memory_space<vmem>>, vector<4x239xf32>
    tpu.vector_store %arg5[%c0_8, %c17], %32 {strides = array<i32>} : memref<36x256xf32, #tpu.memory_space<vmem>>, vector<4x239xf32>,
    %34 = vector.extract_strided_slice %28 {offsets = [0, 0], sizes = [4, 240], strides = [1, 1]} : vector<4x256xf32> to vector<4x240xf32>
    %c4 = arith.constant 4 : index
    %c16 = arith.constant 16 : index
    %35 = vector.load %arg5[%c4, %c16] : memref<36x256xf32, #tpu.memory_space<vmem>>, vector<4x240xf32>
    tpu.vector_store %arg5[%c4, %c16], %34 {strides = array<i32>} : memref<36x256xf32, #tpu.memory_space<vmem>>, vector<4x240xf32>,
    %36 = vector.extract_strided_slice %28 {offsets = [0, 0], sizes = [4, 241], strides = [1, 1]} : vector<4x256xf32> to vector<4x241xf32>
    %37 = vector.extract_strided_slice %26 {offsets = [0, 15], sizes = [1, 241], strides = [1, 1]} : vector<1x256xf32> to vector<1x241xf32>
    %38 = vector.broadcast %37 : vector<1x241xf32> to vector<4x241xf32>
    %39 = arith.mulf %36, %38 : vector<4x241xf32>
    %c8 = arith.constant 8 : index
    %c15 = arith.constant 15 : index
    %40 = vector.load %arg5[%c8, %c15] : memref<36x256xf32, #tpu.memory_space<vmem>>, vector<4x241xf32>
    tpu.vector_store %arg5[%c8, %c15], %39 {strides = array<i32>} : memref<36x256xf32, #tpu.memory_space<vmem>>, vector<4x241xf32>,
    %41 = vector.extract_strided_slice %28 {offsets = [0, 0], sizes = [4, 255], strides = [1, 1]} : vector<4x256xf32> to vector<4x255xf32>
    %42 = vector.extract_strided_slice %22 {offsets = [0, 1], sizes = [1, 255], strides = [1, 1]} : vector<1x256xf32> to vector<1x255xf32>
    %43 = vector.broadcast %42 : vector<1x255xf32> to vector<4x255xf32>
    %44 = arith.mulf %41, %43 : vector<4x255xf32>
    %c12 = arith.constant 12 : index
    %c1 = arith.constant 1 : index
    %45 = vector.load %arg5[%c12, %c1] : memref<36x256xf32, #tpu.memory_space<vmem>>, vector<4x255xf32>
    tpu.vector_store %arg5[%c12, %c1], %44 {strides = array<i32>} : memref<36x256xf32, #tpu.memory_space<vmem>>, vector<4x255xf32>,
    %c16_9 = arith.constant 16 : index
    %c0_10 = arith.constant 0 : index
    %46 = vector.load %arg5[%c16_9, %c0_10] : memref<36x256xf32, #tpu.memory_space<vmem>>, vector<4x256xf32>
    tpu.vector_store %arg5[%c16_9, %c0_10], %28 {strides = array<i32>} : memref<36x256xf32, #tpu.memory_space<vmem>>, vector<4x256xf32>,
    %47 = vector.extract_strided_slice %28 {offsets = [0, 1], sizes = [4, 255], strides = [1, 1]} : vector<4x256xf32> to vector<4x255xf32>
    %48 = vector.extract_strided_slice %26 {offsets = [0, 0], sizes = [1, 255], strides = [1, 1]} : vector<1x256xf32> to vector<1x255xf32>
    %49 = vector.broadcast %48 : vector<1x255xf32> to vector<4x255xf32>
    %50 = arith.mulf %47, %49 : vector<4x255xf32>
    %c20 = arith.constant 20 : index
    %c0_11 = arith.constant 0 : index
    %51 = vector.load %arg5[%c20, %c0_11] : memref<36x256xf32, #tpu.memory_space<vmem>>, vector<4x255xf32>
    tpu.vector_store %arg5[%c20, %c0_11], %50 {strides = array<i32>} : memref<36x256xf32, #tpu.memory_space<vmem>>, vector<4x255xf32>,
    %52 = vector.extract_strided_slice %28 {offsets = [0, 15], sizes = [4, 241], strides = [1, 1]} : vector<4x256xf32> to vector<4x241xf32>
    %53 = vector.extract_strided_slice %22 {offsets = [0, 0], sizes = [1, 241], strides = [1, 1]} : vector<1x256xf32> to vector<1x241xf32>
    %54 = vector.broadcast %53 : vector<1x241xf32> to vector<4x241xf32>
    %55 = arith.mulf %52, %54 : vector<4x241xf32>
    %c24 = arith.constant 24 : index
    %c0_12 = arith.constant 0 : index
    %56 = vector.load %arg5[%c24, %c0_12] : memref<36x256xf32, #tpu.memory_space<vmem>>, vector<4x241xf32>
    tpu.vector_store %arg5[%c24, %c0_12], %55 {strides = array<i32>} : memref<36x256xf32, #tpu.memory_space<vmem>>, vector<4x241xf32>,
    %57 = vector.extract_strided_slice %28 {offsets = [0, 16], sizes = [4, 240], strides = [1, 1]} : vector<4x256xf32> to vector<4x240xf32>
    %c28 = arith.constant 28 : index
    %c0_13 = arith.constant 0 : index
    %58 = vector.load %arg5[%c28, %c0_13] : memref<36x256xf32, #tpu.memory_space<vmem>>, vector<4x240xf32>
    tpu.vector_store %arg5[%c28, %c0_13], %57 {strides = array<i32>} : memref<36x256xf32, #tpu.memory_space<vmem>>, vector<4x240xf32>,
    %59 = vector.extract_strided_slice %28 {offsets = [0, 17], sizes = [4, 239], strides = [1, 1]} : vector<4x256xf32> to vector<4x239xf32>
    %60 = vector.extract_strided_slice %26 {offsets = [0, 0], sizes = [1, 239], strides = [1, 1]} : vector<1x256xf32> to vector<1x239xf32>
    %61 = vector.broadcast %60 : vector<1x239xf32> to vector<4x239xf32>
    %62 = arith.mulf %59, %61 : vector<4x239xf32>
    %c32 = arith.constant 32 : index
    %c0_14 = arith.constant 0 : index
    %63 = vector.load %arg5[%c32, %c0_14] : memref<36x256xf32, #tpu.memory_space<vmem>>, vector<4x239xf32>
    tpu.vector_store %arg5[%c32, %c0_14], %62 {strides = array<i32>} : memref<36x256xf32, #tpu.memory_space<vmem>>, vector<4x239xf32>,
    %c0_15 = arith.constant 0 : index
    %c0_16 = arith.constant 0 : index
    %c0_17 = arith.constant 0 : index
    %64 = vector.load %arg2[%c0_15, %c0_16, %c0_17] : memref<3x4x36xbf16, #tpu.memory_space<vmem>>, vector<1x4x36xbf16>
    %65 = vector.shape_cast %64 : vector<1x4x36xbf16> to vector<4x36xbf16>
    %c0_18 = arith.constant 0 : index
    %c0_19 = arith.constant 0 : index
    %66 = vector.load %arg5[%c0_18, %c0_19] : memref<36x256xf32, #tpu.memory_space<vmem>>, vector<36x256xf32>
    %67 = arith.truncf %66 : vector<36x256xf32> to vector<36x256xbf16>
    %cst_20 = arith.constant dense<0.000000e+00> : vector<4x256xf32>
    %68 = tpu.matmul %65, %67, %cst_20 {dimension_numbers = #tpu.dot_dimension_numbers<[1], [0], [0], [1], [0, 0, 1, 1], [], []>} : vector<4x36xbf16>, vector<36x256xbf16>, vector<4x256xf32> -> vector<4x256xf32>
    %c0_21 = arith.constant 0 : index
    %c0_22 = arith.constant 0 : index
    %c0_23 = arith.constant 0 : index
    %69 = vector.load %arg3[%c0_21, %c0_22, %c0_23] : memref<3x4x1xf32, #tpu.memory_space<vmem>>, vector<1x4x1xf32>
    %70 = vector.shape_cast %69 : vector<1x4x1xf32> to vector<4x1xf32>
    %71 = vector.broadcast %70 : vector<4x1xf32> to vector<4x256xf32>
    %72 = arith.addf %68, %71 : vector<4x256xf32>
    %cst_24 = arith.constant 0.000000e+00 : f32
    %73 = vector.broadcast %cst_24 : f32 to vector<4x256xf32>
    %74 = arith.maximumf %72, %73 : vector<4x256xf32>
    %75 = vector.extract_strided_slice %74 {offsets = [0, 0], sizes = [4, 239], strides = [1, 1]} : vector<4x256xf32> to vector<4x239xf32>
    %76 = vector.extract_strided_slice %22 {offsets = [0, 17], sizes = [1, 239], strides = [1, 1]} : vector<1x256xf32> to vector<1x239xf32>
    %77 = vector.broadcast %76 : vector<1x239xf32> to vector<4x239xf32>
    %78 = arith.mulf %75, %77 : vector<4x239xf32>
    %c0_25 = arith.constant 0 : index
    %c17_26 = arith.constant 17 : index
    %79 = vector.load %arg5[%c0_25, %c17_26] : memref<36x256xf32, #tpu.memory_space<vmem>>, vector<4x239xf32>
    tpu.vector_store %arg5[%c0_25, %c17_26], %78 {strides = array<i32>} : memref<36x256xf32, #tpu.memory_space<vmem>>, vector<4x239xf32>,
    %80 = vector.extract_strided_slice %74 {offsets = [0, 0], sizes = [4, 240], strides = [1, 1]} : vector<4x256xf32> to vector<4x240xf32>
    %c4_27 = arith.constant 4 : index
    %c16_28 = arith.constant 16 : index
    %81 = vector.load %arg5[%c4_27, %c16_28] : memref<36x256xf32, #tpu.memory_space<vmem>>, vector<4x240xf32>
    tpu.vector_store %arg5[%c4_27, %c16_28], %80 {strides = array<i32>} : memref<36x256xf32, #tpu.memory_space<vmem>>, vector<4x240xf32>,
    %82 = vector.extract_strided_slice %74 {offsets = [0, 0], sizes = [4, 241], strides = [1, 1]} : vector<4x256xf32> to vector<4x241xf32>
    %83 = vector.extract_strided_slice %26 {offsets = [0, 15], sizes = [1, 241], strides = [1, 1]} : vector<1x256xf32> to vector<1x241xf32>
    %84 = vector.broadcast %83 : vector<1x241xf32> to vector<4x241xf32>
    %85 = arith.mulf %82, %84 : vector<4x241xf32>
    %c8_29 = arith.constant 8 : index
    %c15_30 = arith.constant 15 : index
    %86 = vector.load %arg5[%c8_29, %c15_30] : memref<36x256xf32, #tpu.memory_space<vmem>>, vector<4x241xf32>
    tpu.vector_store %arg5[%c8_29, %c15_30], %85 {strides = array<i32>} : memref<36x256xf32, #tpu.memory_space<vmem>>, vector<4x241xf32>,
    %87 = vector.extract_strided_slice %74 {offsets = [0, 0], sizes = [4, 255], strides = [1, 1]} : vector<4x256xf32> to vector<4x255xf32>
    %88 = vector.extract_strided_slice %22 {offsets = [0, 1], sizes = [1, 255], strides = [1, 1]} : vector<1x256xf32> to vector<1x255xf32>
    %89 = vector.broadcast %88 : vector<1x255xf32> to vector<4x255xf32>
    %90 = arith.mulf %87, %89 : vector<4x255xf32>
    %c12_31 = arith.constant 12 : index
    %c1_32 = arith.constant 1 : index
    %91 = vector.load %arg5[%c12_31, %c1_32] : memref<36x256xf32, #tpu.memory_space<vmem>>, vector<4x255xf32>
    tpu.vector_store %arg5[%c12_31, %c1_32], %90 {strides = array<i32>} : memref<36x256xf32, #tpu.memory_space<vmem>>, vector<4x255xf32>,
    %c16_33 = arith.constant 16 : index
    %c0_34 = arith.constant 0 : index
    %92 = vector.load %arg5[%c16_33, %c0_34] : memref<36x256xf32, #tpu.memory_space<vmem>>, vector<4x256xf32>
    tpu.vector_store %arg5[%c16_33, %c0_34], %74 {strides = array<i32>} : memref<36x256xf32, #tpu.memory_space<vmem>>, vector<4x256xf32>,
    %93 = vector.extract_strided_slice %74 {offsets = [0, 1], sizes = [4, 255], strides = [1, 1]} : vector<4x256xf32> to vector<4x255xf32>
    %94 = vector.extract_strided_slice %26 {offsets = [0, 0], sizes = [1, 255], strides = [1, 1]} : vector<1x256xf32> to vector<1x255xf32>
    %95 = vector.broadcast %94 : vector<1x255xf32> to vector<4x255xf32>
    %96 = arith.mulf %93, %95 : vector<4x255xf32>
    %c20_35 = arith.constant 20 : index
    %c0_36 = arith.constant 0 : index
    %97 = vector.load %arg5[%c20_35, %c0_36] : memref<36x256xf32, #tpu.memory_space<vmem>>, vector<4x255xf32>
    tpu.vector_store %arg5[%c20_35, %c0_36], %96 {strides = array<i32>} : memref<36x256xf32, #tpu.memory_space<vmem>>, vector<4x255xf32>,
    %98 = vector.extract_strided_slice %74 {offsets = [0, 15], sizes = [4, 241], strides = [1, 1]} : vector<4x256xf32> to vector<4x241xf32>
    %99 = vector.extract_strided_slice %22 {offsets = [0, 0], sizes = [1, 241], strides = [1, 1]} : vector<1x256xf32> to vector<1x241xf32>
    %100 = vector.broadcast %99 : vector<1x241xf32> to vector<4x241xf32>
    %101 = arith.mulf %98, %100 : vector<4x241xf32>
    %c24_37 = arith.constant 24 : index
    %c0_38 = arith.constant 0 : index
    %102 = vector.load %arg5[%c24_37, %c0_38] : memref<36x256xf32, #tpu.memory_space<vmem>>, vector<4x241xf32>
    tpu.vector_store %arg5[%c24_37, %c0_38], %101 {strides = array<i32>} : memref<36x256xf32, #tpu.memory_space<vmem>>, vector<4x241xf32>,
    %103 = vector.extract_strided_slice %74 {offsets = [0, 16], sizes = [4, 240], strides = [1, 1]} : vector<4x256xf32> to vector<4x240xf32>
    %c28_39 = arith.constant 28 : index
    %c0_40 = arith.constant 0 : index
    %104 = vector.load %arg5[%c28_39, %c0_40] : memref<36x256xf32, #tpu.memory_space<vmem>>, vector<4x240xf32>
    tpu.vector_store %arg5[%c28_39, %c0_40], %103 {strides = array<i32>} : memref<36x256xf32, #tpu.memory_space<vmem>>, vector<4x240xf32>,
    %105 = vector.extract_strided_slice %74 {offsets = [0, 17], sizes = [4, 239], strides = [1, 1]} : vector<4x256xf32> to vector<4x239xf32>
    %106 = vector.extract_strided_slice %26 {offsets = [0, 0], sizes = [1, 239], strides = [1, 1]} : vector<1x256xf32> to vector<1x239xf32>
    %107 = vector.broadcast %106 : vector<1x239xf32> to vector<4x239xf32>
    %108 = arith.mulf %105, %107 : vector<4x239xf32>
    %c32_41 = arith.constant 32 : index
    %c0_42 = arith.constant 0 : index
    %109 = vector.load %arg5[%c32_41, %c0_42] : memref<36x256xf32, #tpu.memory_space<vmem>>, vector<4x239xf32>
    tpu.vector_store %arg5[%c32_41, %c0_42], %108 {strides = array<i32>} : memref<36x256xf32, #tpu.memory_space<vmem>>, vector<4x239xf32>,
    %c1_43 = arith.constant 1 : index
    %c0_44 = arith.constant 0 : index
    %c0_45 = arith.constant 0 : index
    %110 = vector.load %arg2[%c1_43, %c0_44, %c0_45] : memref<3x4x36xbf16, #tpu.memory_space<vmem>>, vector<1x4x36xbf16>
    %111 = vector.shape_cast %110 : vector<1x4x36xbf16> to vector<4x36xbf16>
    %c0_46 = arith.constant 0 : index
    %c0_47 = arith.constant 0 : index
    %112 = vector.load %arg5[%c0_46, %c0_47] : memref<36x256xf32, #tpu.memory_space<vmem>>, vector<36x256xf32>
    %113 = arith.truncf %112 : vector<36x256xf32> to vector<36x256xbf16>
    %cst_48 = arith.constant dense<0.000000e+00> : vector<4x256xf32>
    %114 = tpu.matmul %111, %113, %cst_48 {dimension_numbers = #tpu.dot_dimension_numbers<[1], [0], [0], [1], [0, 0, 1, 1], [], []>} : vector<4x36xbf16>, vector<36x256xbf16>, vector<4x256xf32> -> vector<4x256xf32>
    %c1_49 = arith.constant 1 : index
    %c0_50 = arith.constant 0 : index
    %c0_51 = arith.constant 0 : index
    %115 = vector.load %arg3[%c1_49, %c0_50, %c0_51] : memref<3x4x1xf32, #tpu.memory_space<vmem>>, vector<1x4x1xf32>
    %116 = vector.shape_cast %115 : vector<1x4x1xf32> to vector<4x1xf32>
    %117 = vector.broadcast %116 : vector<4x1xf32> to vector<4x256xf32>
    %118 = arith.addf %114, %117 : vector<4x256xf32>
    %cst_52 = arith.constant 0.000000e+00 : f32
    %119 = vector.broadcast %cst_52 : f32 to vector<4x256xf32>
    %120 = arith.maximumf %118, %119 : vector<4x256xf32>
    %121 = vector.extract_strided_slice %120 {offsets = [0, 0], sizes = [4, 239], strides = [1, 1]} : vector<4x256xf32> to vector<4x239xf32>
    %122 = vector.extract_strided_slice %22 {offsets = [0, 17], sizes = [1, 239], strides = [1, 1]} : vector<1x256xf32> to vector<1x239xf32>
    %123 = vector.broadcast %122 : vector<1x239xf32> to vector<4x239xf32>
    %124 = arith.mulf %121, %123 : vector<4x239xf32>
    %c0_53 = arith.constant 0 : index
    %c17_54 = arith.constant 17 : index
    %125 = vector.load %arg5[%c0_53, %c17_54] : memref<36x256xf32, #tpu.memory_space<vmem>>, vector<4x239xf32>
    tpu.vector_store %arg5[%c0_53, %c17_54], %124 {strides = array<i32>} : memref<36x256xf32, #tpu.memory_space<vmem>>, vector<4x239xf32>,
    %126 = vector.extract_strided_slice %120 {offsets = [0, 0], sizes = [4, 240], strides = [1, 1]} : vector<4x256xf32> to vector<4x240xf32>
    %c4_55 = arith.constant 4 : index
    %c16_56 = arith.constant 16 : index
    %127 = vector.load %arg5[%c4_55, %c16_56] : memref<36x256xf32, #tpu.memory_space<vmem>>, vector<4x240xf32>
    tpu.vector_store %arg5[%c4_55, %c16_56], %126 {strides = array<i32>} : memref<36x256xf32, #tpu.memory_space<vmem>>, vector<4x240xf32>,
    %128 = vector.extract_strided_slice %120 {offsets = [0, 0], sizes = [4, 241], strides = [1, 1]} : vector<4x256xf32> to vector<4x241xf32>
    %129 = vector.extract_strided_slice %26 {offsets = [0, 15], sizes = [1, 241], strides = [1, 1]} : vector<1x256xf32> to vector<1x241xf32>
    %130 = vector.broadcast %129 : vector<1x241xf32> to vector<4x241xf32>
    %131 = arith.mulf %128, %130 : vector<4x241xf32>
    %c8_57 = arith.constant 8 : index
    %c15_58 = arith.constant 15 : index
    %132 = vector.load %arg5[%c8_57, %c15_58] : memref<36x256xf32, #tpu.memory_space<vmem>>, vector<4x241xf32>
    tpu.vector_store %arg5[%c8_57, %c15_58], %131 {strides = array<i32>} : memref<36x256xf32, #tpu.memory_space<vmem>>, vector<4x241xf32>,
    %133 = vector.extract_strided_slice %120 {offsets = [0, 0], sizes = [4, 255], strides = [1, 1]} : vector<4x256xf32> to vector<4x255xf32>
    %134 = vector.extract_strided_slice %22 {offsets = [0, 1], sizes = [1, 255], strides = [1, 1]} : vector<1x256xf32> to vector<1x255xf32>
    %135 = vector.broadcast %134 : vector<1x255xf32> to vector<4x255xf32>
    %136 = arith.mulf %133, %135 : vector<4x255xf32>
    %c12_59 = arith.constant 12 : index
    %c1_60 = arith.constant 1 : index
    %137 = vector.load %arg5[%c12_59, %c1_60] : memref<36x256xf32, #tpu.memory_space<vmem>>, vector<4x255xf32>
    tpu.vector_store %arg5[%c12_59, %c1_60], %136 {strides = array<i32>} : memref<36x256xf32, #tpu.memory_space<vmem>>, vector<4x255xf32>,
    %c16_61 = arith.constant 16 : index
    %c0_62 = arith.constant 0 : index
    %138 = vector.load %arg5[%c16_61, %c0_62] : memref<36x256xf32, #tpu.memory_space<vmem>>, vector<4x256xf32>
    tpu.vector_store %arg5[%c16_61, %c0_62], %120 {strides = array<i32>} : memref<36x256xf32, #tpu.memory_space<vmem>>, vector<4x256xf32>,
    %139 = vector.extract_strided_slice %120 {offsets = [0, 1], sizes = [4, 255], strides = [1, 1]} : vector<4x256xf32> to vector<4x255xf32>
    %140 = vector.extract_strided_slice %26 {offsets = [0, 0], sizes = [1, 255], strides = [1, 1]} : vector<1x256xf32> to vector<1x255xf32>
    %141 = vector.broadcast %140 : vector<1x255xf32> to vector<4x255xf32>
    %142 = arith.mulf %139, %141 : vector<4x255xf32>
    %c20_63 = arith.constant 20 : index
    %c0_64 = arith.constant 0 : index
    %143 = vector.load %arg5[%c20_63, %c0_64] : memref<36x256xf32, #tpu.memory_space<vmem>>, vector<4x255xf32>
    tpu.vector_store %arg5[%c20_63, %c0_64], %142 {strides = array<i32>} : memref<36x256xf32, #tpu.memory_space<vmem>>, vector<4x255xf32>,
    %144 = vector.extract_strided_slice %120 {offsets = [0, 15], sizes = [4, 241], strides = [1, 1]} : vector<4x256xf32> to vector<4x241xf32>
    %145 = vector.extract_strided_slice %22 {offsets = [0, 0], sizes = [1, 241], strides = [1, 1]} : vector<1x256xf32> to vector<1x241xf32>
    %146 = vector.broadcast %145 : vector<1x241xf32> to vector<4x241xf32>
    %147 = arith.mulf %144, %146 : vector<4x241xf32>
    %c24_65 = arith.constant 24 : index
    %c0_66 = arith.constant 0 : index
    %148 = vector.load %arg5[%c24_65, %c0_66] : memref<36x256xf32, #tpu.memory_space<vmem>>, vector<4x241xf32>
    tpu.vector_store %arg5[%c24_65, %c0_66], %147 {strides = array<i32>} : memref<36x256xf32, #tpu.memory_space<vmem>>, vector<4x241xf32>,
    %149 = vector.extract_strided_slice %120 {offsets = [0, 16], sizes = [4, 240], strides = [1, 1]} : vector<4x256xf32> to vector<4x240xf32>
    %c28_67 = arith.constant 28 : index
    %c0_68 = arith.constant 0 : index
    %150 = vector.load %arg5[%c28_67, %c0_68] : memref<36x256xf32, #tpu.memory_space<vmem>>, vector<4x240xf32>
    tpu.vector_store %arg5[%c28_67, %c0_68], %149 {strides = array<i32>} : memref<36x256xf32, #tpu.memory_space<vmem>>, vector<4x240xf32>,
    %151 = vector.extract_strided_slice %120 {offsets = [0, 17], sizes = [4, 239], strides = [1, 1]} : vector<4x256xf32> to vector<4x239xf32>
    %152 = vector.extract_strided_slice %26 {offsets = [0, 0], sizes = [1, 239], strides = [1, 1]} : vector<1x256xf32> to vector<1x239xf32>
    %153 = vector.broadcast %152 : vector<1x239xf32> to vector<4x239xf32>
    %154 = arith.mulf %151, %153 : vector<4x239xf32>
    %c32_69 = arith.constant 32 : index
    %c0_70 = arith.constant 0 : index
    %155 = vector.load %arg5[%c32_69, %c0_70] : memref<36x256xf32, #tpu.memory_space<vmem>>, vector<4x239xf32>
    tpu.vector_store %arg5[%c32_69, %c0_70], %154 {strides = array<i32>} : memref<36x256xf32, #tpu.memory_space<vmem>>, vector<4x239xf32>,
    %c2 = arith.constant 2 : index
    %c0_71 = arith.constant 0 : index
    %c0_72 = arith.constant 0 : index
    %156 = vector.load %arg2[%c2, %c0_71, %c0_72] : memref<3x4x36xbf16, #tpu.memory_space<vmem>>, vector<1x4x36xbf16>
    %157 = vector.shape_cast %156 : vector<1x4x36xbf16> to vector<4x36xbf16>
    %c0_73 = arith.constant 0 : index
    %c0_74 = arith.constant 0 : index
    %158 = vector.load %arg5[%c0_73, %c0_74] : memref<36x256xf32, #tpu.memory_space<vmem>>, vector<36x256xf32>
    %159 = arith.truncf %158 : vector<36x256xf32> to vector<36x256xbf16>
    %cst_75 = arith.constant dense<0.000000e+00> : vector<4x256xf32>
    %160 = tpu.matmul %157, %159, %cst_75 {dimension_numbers = #tpu.dot_dimension_numbers<[1], [0], [0], [1], [0, 0, 1, 1], [], []>} : vector<4x36xbf16>, vector<36x256xbf16>, vector<4x256xf32> -> vector<4x256xf32>
    %c2_76 = arith.constant 2 : index
    %c0_77 = arith.constant 0 : index
    %c0_78 = arith.constant 0 : index
    %161 = vector.load %arg3[%c2_76, %c0_77, %c0_78] : memref<3x4x1xf32, #tpu.memory_space<vmem>>, vector<1x4x1xf32>
    %162 = vector.shape_cast %161 : vector<1x4x1xf32> to vector<4x1xf32>
    %163 = vector.broadcast %162 : vector<4x1xf32> to vector<4x256xf32>
    %164 = arith.addf %160, %163 : vector<4x256xf32>
    %cst_79 = arith.constant 0.000000e+00 : f32
    %165 = vector.broadcast %cst_79 : f32 to vector<4x256xf32>
    %166 = arith.maximumf %164, %165 : vector<4x256xf32>
    %167 = arith.addf %166, %28 : vector<4x256xf32>
    %c0_80 = arith.constant 0 : index
    %c0_81 = arith.constant 0 : index
    %c0_82 = arith.constant 0 : index
    %168 = vector.load %arg4[%c0_80, %c0_81, %c0_82] : memref<1x4x256xf32, #tpu.memory_space<vmem>>, vector<1x4x256xf32>
    %169 = vector.shape_cast %168 : vector<1x4x256xf32> to vector<4x256xf32>
    %170 = vector.shape_cast %167 : vector<4x256xf32> to vector<1x4x256xf32>
    tpu.vector_store %arg4[%c0_80, %c0_81, %c0_82], %170 {strides = array<i32>} : memref<1x4x256xf32, #tpu.memory_space<vmem>>, vector<1x4x256xf32>,
    return
  }
  func.func @transform_0(%arg0: i32) -> (i32, i32, i32) {
    %c0_i32 = arith.constant 0 : i32
    %c0_i32_0 = arith.constant 0 : i32
    %c0_i32_1 = arith.constant 0 : i32
    return %arg0, %c0_i32, %c0_i32_0 : i32, i32, i32
  }
  func.func @transform_1(%arg0: i32) -> (i32, i32, i32) {
    %c0_i32 = arith.constant 0 : i32
    %c0_i32_0 = arith.constant 0 : i32
    %c0_i32_1 = arith.constant 0 : i32
    %c0_i32_2 = arith.constant 0 : i32
    return %c0_i32, %c0_i32_0, %c0_i32_1 : i32, i32, i32
  }
  func.func @transform_2(%arg0: i32) -> (i32, i32, i32) {
    %c0_i32 = arith.constant 0 : i32
    %c0_i32_0 = arith.constant 0 : i32
    %c0_i32_1 = arith.constant 0 : i32
    %c0_i32_2 = arith.constant 0 : i32
    return %c0_i32, %c0_i32_0, %c0_i32_1 : i32, i32, i32
  }
  func.func @transform_3(%arg0: i32) -> (i32, i32, i32) {
    %c0_i32 = arith.constant 0 : i32
    %c0_i32_0 = arith.constant 0 : i32
    %c0_i32_1 = arith.constant 0 : i32
    return %arg0, %c0_i32, %c0_i32_0 : i32, i32, i32
  }
}

</mosaic_0001>

<llo_original>
// kernel: rlfb_forward.1
$region0: #{rlfb_forward.1}
  #allocation0 [shape = 'u32[]', space=smem, size = 0x4, offset = 0x4, fixed_abs, tag = 'smem constant byte address 0x4 - core index']
  #allocation1 [shape = 'u32[144,128]{1,0:T(1,128)}', space=vmem, size = 0x12000, scoped, tag = 'internal scratch']
  #allocation2 [shape = 'f32[36,256]{1,0:T(8,128)}', space=vmem, size = 0xa000, scoped, tag = 'scratch operand']
  %s0 = inlined_call_operand.vmem [shape: f32[2,4,256], index: 0, kind: input, shape index: {}]
  %s1 = inlined_call_operand.vmem [shape: bf16[3,4,36], index: 1, kind: input, shape index: {}]
  %s2 = inlined_call_operand.vmem [shape: f32[3,4,1], index: 2, kind: input, shape index: {}]
  %s3 = inlined_call_operand.vmem [shape: f32[2,4,256], index: 3, kind: output, shape index: {}]
  %s4 = sld [smem:[#allocation0]]
  $region45: #{rlfb_forward.1} parent=0
    _
  %s6 = ssub.s32 1, %s4
  %s7 = scalar_select 0, %s6, %s4
  loop: start=0, step=1, limit=4
  $region2: #{rlfb_forward.1} parent=0 // loop_pre_header
    _
  $region3: #{rlfb_forward.1} parent=0 // loop_header
    %s9 = sphi 0, %s13
    %p10 = scmp.ge.s32.totalorder %s9, 4
    %s19 = sphi 0, %s21
    %s22 = sphi 0, %s19
    %s23 = sphi 0, %s22
    %s39 = sphi 0, %s23
    %s43 = sphi 0, %s43
    %s45 = sphi 0, %s43
    %s46 = sphi 0, %s45
    %s60 = sphi 0, %s46
    %s64 = sphi 0, %s64
    %s66 = sphi 0, %s64
    %s67 = sphi 0, %s66
    %s81 = sphi 0, %s67
    %s87 = sphi 0, %s89
    %s90 = sphi 0, %s87
    %s91 = sphi 0, %s90
    %s107 = sphi 0, %s91
  $region4: #{rlfb_forward.1} parent=0 // loop_header_branch
    %12 = sbr.rel (%p10) target = $region8
  $region5: #{rlfb_forward.1} parent=0 // loop_body
    %s14 = ssub.s32 %s9, 1
    %s15 = ssub.s32 %s9, 2
    %s16 = sadd.s32 %s9, 1
    %s17 = ssub.s32 %s9, %s16
    %p18 = scmp.eq.s32.totalorder %s17, 0
    %s20 = sadd.s32 %s19, 1
    %s21 = scalar_select %p18, %s19, %s20
    %p24 = pneg %p18
    %p25 = scmp.eq.s32.totalorder %s9, 1
    %p26 = por %p24, %p25
    %p27 = scmp.ne.s32.totalorder %s19, %s22
    %p28 = scmp.eq.s32.totalorder %s9, 0
    %p29 = por %p27, %p28
    %p30 = scmp.ne.s32.totalorder %s19, %s22
    %p31 = scmp.eq.s32.totalorder %s14, 1
    %p32 = por %p30, %p31
    %p33 = scmp.ne.s32.totalorder %s22, %s23
    %p34 = scmp.eq.s32.totalorder %s14, 0
    %p35 = por %p33, %p34
    %p36 = scmp.ne.s32.totalorder %s22, %s23
    %p37 = scmp.eq.s32.totalorder %s15, 1
    %p38 = por %p36, %p37
    %p40 = scmp.ne.s32.totalorder %s23, %s39
    %p41 = scmp.eq.s32.totalorder %s15, 0
    %p42 = por %p40, %p41
    %s44 = sadd.s32 %s43, 1
    %p47 = scmp.eq.s32.totalorder %s9, 1
    %p48 = scmp.ne.s32.totalorder %s43, %s45
    %p49 = scmp.eq.s32.totalorder %s9, 0
    %p50 = por %p48, %p49
    %p51 = scmp.ne.s32.totalorder %s43, %s45
    %p52 = scmp.eq.s32.totalorder %s14, 1
    %p53 = por %p51, %p52
    %p54 = scmp.ne.s32.totalorder %s45, %s46
    %p55 = scmp.eq.s32.totalorder %s14, 0
    %p56 = por %p54, %p55
    %p57 = scmp.ne.s32.totalorder %s45, %s46
    %p58 = scmp.eq.s32.totalorder %s15, 1
    %p59 = por %p57, %p58
    %p61 = scmp.ne.s32.totalorder %s46, %s60
    %p62 = scmp.eq.s32.totalorder %s15, 0
    %p63 = por %p61, %p62
    %s65 = sadd.s32 %s64, 1
    %p68 = scmp.eq.s32.totalorder %s9, 1
    %p69 = scmp.ne.s32.totalorder %s64, %s66
    %p70 = scmp.eq.s32.totalorder %s9, 0
    %p71 = por %p69, %p70
    %p72 = scmp.ne.s32.totalorder %s64, %s66
    %p73 = scmp.eq.s32.totalorder %s14, 1
    %p74 = por %p72, %p73
    %p75 = scmp.ne.s32.totalorder %s66, %s67
    %p76 = scmp.eq.s32.totalorder %s14, 0
    %p77 = por %p75, %p76
    %p78 = scmp.ne.s32.totalorder %s66, %s67
    %p79 = scmp.eq.s32.totalorder %s15, 1
    %p80 = por %p78, %p79
    %p82 = scmp.ne.s32.totalorder %s67, %s81
    %p83 = scmp.eq.s32.totalorder %s15, 0
    %p84 = por %p82, %p83
    %s85 = ssub.s32 %s9, %s16
    %p86 = scmp.eq.s32.totalorder %s85, 0
    %s88 = sadd.s32 %s87, 1
    %s89 = scalar_select %p86, %s87, %s88
    %p92 = pneg %p86
    %p93 = scmp.eq.s32.totalorder %s9, 1
    %p94 = por %p92, %p93
    %p95 = scmp.ne.s32.totalorder %s87, %s90
    %p96 = scmp.eq.s32.totalorder %s9, 0
    %p97 = por %p95, %p96
    %p98 = scmp.ne.s32.totalorder %s87, %s90
    %p99 = scmp.eq.s32.totalorder %s14, 1
    %p100 = por %p98, %p99
    %p101 = scmp.ne.s32.totalorder %s90, %s91
    %p102 = scmp.eq.s32.totalorder %s14, 0
    %p103 = por %p101, %p102
    %p104 = scmp.ne.s32.totalorder %s90, %s91
    %p105 = scmp.eq.s32.totalorder %s15, 1
    %p106 = por %p104, %p105
    %p108 = scmp.ne.s32.totalorder %s91, %s107
    %p109 = scmp.eq.s32.totalorder %s15, 0
    %p110 = por %p108, %p109
    %p111 = scmp.le.s32.totalorder 1, %s9
    %p112 = scmp.lt.s32.totalorder %s9, 3
    %p113 = pnand %p111, %p112
    %p114 = pneg %p113
    // Predicated region
    $region9: #{rlfb_forward.1} parent=5 // pred_check
      _
    $region10: #{rlfb_forward.1} parent=5 // pred_check_branch
      %116 = sbr.rel (%p113) target = $region12
    $region11: #{rlfb_forward.1} parent=5 // pred_region
      %s117 = ssub.s32 %s9, 1
      // Predicated region
      $region13: #{rlfb_forward.1} parent=11 // pred_check
        %p118 = pneg %p56
      $region14: #{rlfb_forward.1} parent=11 // pred_check_branch
        %120 = sbr.rel (%p118) target = $region16
      $region15: #{rlfb_forward.1} parent=11 // pred_region
        _
      $region16: #{rlfb_forward.1} parent=11 // pred_fallthru
        _
      // Predicated region
      $region17: #{rlfb_forward.1} parent=11 // pred_check
        %p121 = pneg %p77
      $region18: #{rlfb_forward.1} parent=11 // pred_check_branch
        %123 = sbr.rel (%p121) target = $region20
      $region19: #{rlfb_forward.1} parent=11 // pred_region
        _
      $region20: #{rlfb_forward.1} parent=11 // pred_fallthru
        _
    $region12: #{rlfb_forward.1} parent=5 // pred_fallthru
      _
    %p124 = scmp.lt.s32.totalorder %s9, 2
    // Predicated region
    $region21: #{rlfb_forward.1} parent=5 // pred_check
      %p125 = pneg %p124
    $region22: #{rlfb_forward.1} parent=5 // pred_check_branch
      %127 = sbr.rel (%p125) target = $region24
    $region23: #{rlfb_forward.1} parent=5 // pred_region
      // Predicated region
      $region25: #{rlfb_forward.1} parent=23 // pred_check
        %p128 = pneg %p29
      $region26: #{rlfb_forward.1} parent=23 // pred_check_branch
        %130 = sbr.rel (%p128) target = $region28
      $region27: #{rlfb_forward.1} parent=23 // pred_region
        %p131 = scmp.lt.s32.totalorder %s9, 1
        %s132 = scalar_select %p131, %s9, 1
        %s133 = smul.addr %s132, 2
        %s134 = smul.addr %s133, 4
        %s135 = scalar_lea.vmem %s0, %s134
      $region28: #{rlfb_forward.1} parent=23 // pred_fallthru
        _
    $region24: #{rlfb_forward.1} parent=5 // pred_fallthru
      _
    %p136 = scmp.le.s32.totalorder 1, %s9
    %p137 = scmp.lt.s32.totalorder %s9, 3
    %p138 = pnand %p136, %p137
    %p139 = pneg %p138
    // Predicated region
    $region29: #{rlfb_forward.1} parent=5 // pred_check
      _
    $region30: #{rlfb_forward.1} parent=5 // pred_check_branch
      %141 = sbr.rel (%p138) target = $region32
    $region31: #{rlfb_forward.1} parent=5 // pred_region
      %s142 = ssub.s32 %s9, 1
      %p143 = scmp.lt.s32.totalorder %s14, 1
      %s144 = scalar_select %p143, %s14, 1
      %s145 = smul.addr %s144, 2
      %s146 = smul.addr %s145, 4
      %s147 = scalar_lea.vmem %s0, %s146
      %p148 = pneg %p35
      %p149 = pneg %p32
      %p150 = pneg %p56
      %p151 = pneg %p53
      %p152 = pneg %p77
      %p153 = pneg %p74
      %p154 = pneg %p103
      %p155 = pneg %p100
      %p156 = scmp.lt.s32.totalorder %s14, 1
      %s157 = scalar_select %p156, %s14, 1
      %s158 = smul.addr %s157, 2
      %s159 = smul.addr %s158, 4
      %s160 = scalar_lea.vmem %s3, %s159
      %p161 = scmp.lt.s32.totalorder %s14, 1
      %s162 = scalar_select %p161, %s14, 1
      %s163 = smul.addr %s162, 2
      %s164 = smul.addr %s163, 4
      %s165 = scalar_lea.vmem %s0, %s164
      %p166 = scmp.lt.s32.totalorder %s14, 1
      %s167 = scalar_select %p166, %s14, 1
      %s168 = smul.addr %s167, 2
      %s169 = smul.addr %s168, 4
      %s170 = scalar_lea.vmem %s3, %s169
      %172 = vst [vmem:[#allocation2] sm:$0xff] 0.0
      %173 = vst [vmem:[#allocation2 + $0x8] sm:$0xff] 0.0
      %174 = vst [vmem:[#allocation2 + $0x10] sm:$0xff] 0.0
      %175 = vst [vmem:[#allocation2 + $0x18] sm:$0xff] 0.0
      %176 = vst [vmem:[#allocation2 + $0x20] sm:$0xff] 0.0
      %177 = vst [vmem:[#allocation2 + $0x28] sm:$0xff] 0.0
      %178 = vst [vmem:[#allocation2 + $0x30] sm:$0xff] 0.0
      %179 = vst [vmem:[#allocation2 + $0x38] sm:$0xff] 0.0
      %180 = vst [vmem:[#allocation2 + $0x40] sm:$0xf] 0.0
      %181 = vst [vmem:[#allocation2 + $0x48] sm:$0xf] 0.0
      %v182 = vlaneseq
      %v183 = vand.u32 %v182, 127
      %v184 = vadd.s32 %v183, 128
      %vm185 = vcmp.lt.s32.totalorder %v183, 0
      %v186 = vsub.s32 0, %v183
      %v187 = vsel %vm185, %v186, %v183
      %v188 = vshrl.u32 %v187, 4
      %v189 = vand.u32 %v187, 15
      %v190 = vsub.s32 0, %v189
      %v191 = vsel %vm185, %v190, %v189
      %vm192 = vcmp.lt.s32.totalorder %v184, 0
      %v193 = vsub.s32 0, %v184
      %v194 = vsel %vm192, %v193, %v184
      %v195 = vshrl.u32 %v194, 4
      %v196 = vand.u32 %v194, 15
      %v197 = vsub.s32 0, %v196
      %v198 = vsel %vm192, %v197, %v196
      %vm199 = vcmp.ne.s32.totalorder %v191, 0
      %vm200 = vcmp.ne.s32.totalorder %v198, 0
      %vm201 = vcmp.lt.s32.totalorder %v191, 0
      %vm202 = vcmp.lt.s32.totalorder %v198, 0
      %vm203 = vmand %vm201, %vm199
      %vm204 = vmand %vm202, %vm200
      %v205 = vadd.s32 %v191, 16
      %v206 = vadd.s32 %v198, 16
      %v207 = vsel %vm203, %v205, %v191
      %v208 = vsel %vm204, %v206, %v198
      %vm209 = vcmp.ne.s32.totalorder %v207, 0
      %vm210 = vcmp.ne.s32.totalorder %v208, 0
      %v211 = vsel %vm209, 1, 0
      %v212 = vsel %vm210, 1, 0
      %v213 = vcvt.s32.f32 %v211
      %v214 = vcvt.s32.f32 %v212
      %vm215 = vcmp.ne.s32.totalorder %v207, 15
      %vm216 = vcmp.ne.s32.totalorder %v208, 15
      %v217 = vsel %vm215, 1, 0
      %v218 = vsel %vm216, 1, 0
      %v219 = vcvt.s32.f32 %v217
      %v220 = vcvt.s32.f32 %v218
      %v221 = vld [vmem:[%s165] sm:$0xff]
      %v224 = vcombine.low %v213, %v214
      %225 = vrot.lane.b32.xlu0 %v224, 111
      %v226 = vpop.permute.xlu0 %225
      %v227 = vrot.slane %v226, 4
      %vm228 = vcmask 908288
      %v229 = vsel %vm228, %v226, %v227
      %v231 = vmul.f32 %v221, %v229
      %v233 = vcombine.high %v231, %v231
      %234 = vrot.lane.b32.xlu0 %v231, 17
      %v235 = vpop.permute.xlu0 %234
      %236 = vrot.lane.b32.xlu0 %v233, 17
      %v237 = vpop.permute.xlu0 %236
      %vm238 = vcmask 138240
      %v239 = vsel %vm238, %v235, %v237
      %vm242 = vcmask 1043592
      %243 = vst.msk [vmem:[#allocation2] sm:$0xf] %vm242, %v235
      %244 = vst [vmem:[#allocation2 + $0x8] sm:$0xf] %v239
      %v246 = vcombine.low %v221, %v221
      %247 = vrot.lane.b32.xlu0 %v246, 16
      %v248 = vpop.permute.xlu0 %247
      %249 = vrot.lane.b32.xlu0 %v221, 16
      %v250 = vpop.permute.xlu0 %249
      %vm251 = vcmask 130048
      %v252 = vsel %vm251, %v248, %v250
      %vm255 = vcmask 1047684
      %256 = vst.msk [vmem:[#allocation2] sm:$0xf0] %vm255, %v248
      %257 = vst [vmem:[#allocation2 + $0x8] sm:$0xf0] %v252
      %v260 = vcombine.low %v219, %v220
      %261 = vrot.lane.b32.xlu0 %v260, 113
      %v262 = vpop.permute.xlu0 %261
      %v263 = vrot.slane %v262, 4
      %vm264 = vcmask 924672
      %v265 = vsel %vm264, %v262, %v263
      %v267 = vmul.f32 %v221, %v265
      %v269 = vcombine.high %v267, %v267
      %270 = vrot.lane.b32.xlu0 %v267, 15
      %v271 = vpop.permute.xlu0 %270
      %272 = vrot.lane.b32.xlu0 %v269, 15
      %v273 = vpop.permute.xlu0 %272
      %vm274 = vcmask 121856
      %v275 = vsel %vm274, %v271, %v273
      %vm278 = vcmask 1043576
      %279 = vst.msk [vmem:[#allocation2 + $0x10] sm:$0xf] %vm278, %v271
      %280 = vst [vmem:[#allocation2 + $0x18] sm:$0xf] %v275
      %281 = vrot.lane.b32.xlu0 %v224, 127
      %v282 = vpop.permute.xlu0 %281
      %v283 = vrot.slane %v282, 4
      %vm284 = vcmask 1039360
      %v285 = vsel %vm284, %v282, %v283
      %v287 = vmul.f32 %v221, %v285
      %v289 = vcombine.low %v287, %v287
      %290 = vrot.lane.b32.xlu0 %v289, 1
      %v291 = vpop.permute.xlu0 %290
      %292 = vrot.lane.b32.xlu0 %v287, 1
      %v293 = vpop.permute.xlu0 %292
      %vm294 = vcmask 7168
      %v295 = vsel %vm294, %v291, %v293
      %vm298 = vcmask 1047564
      %299 = vst.msk [vmem:[#allocation2 + $0x10] sm:$0xf0] %vm298, %v291
      %300 = vst [vmem:[#allocation2 + $0x18] sm:$0xf0] %v295
      %v301 = vcombine.high %v221, %v221
      %303 = vst [vmem:[#allocation2 + $0x20] sm:$0xf] %v221
      %304 = vst [vmem:[#allocation2 + $0x28] sm:$0xf] %v301
      %305 = vrot.lane.b32.xlu0 %v260, 1
      %v306 = vpop.permute.xlu0 %305
      %v307 = vrot.slane %v306, 4
      %v308 = vsel %vm294, %v307, %v306
      %v310 = vmul.f32 %v221, %v308
      %v312 = vcombine.low %v310, %v310
      %313 = vrot.lane.b32.xlu0 %v312, 127
      %v314 = vpop.permute.xlu0 %313
      %315 = vrot.lane.b32.xlu0 %v310, 127
      %v316 = vpop.permute.xlu0 %315
      %v317 = vsel %vm284, %v314, %v316
      %320 = vst [vmem:[#allocation2 + $0x20] sm:$0xf0] %v317
      %vm321 = vcmask 1039364
      %322 = vst.msk [vmem:[#allocation2 + $0x28] sm:$0xf0] %vm321, %v316
      %323 = vrot.lane.b32.xlu0 %v224, 15
      %v324 = vpop.permute.xlu0 %323
      %v325 = vrot.slane %v324, 4
      %v326 = vsel %vm274, %v325, %v324
      %v328 = vmul.f32 %v221, %v326
      %v330 = vcombine.high %v328, %v328
      %331 = vrot.lane.b32.xlu0 %v328, 113
      %v332 = vpop.permute.xlu0 %331
      %333 = vrot.lane.b32.xlu0 %v330, 113
      %v334 = vpop.permute.xlu0 %333
      %v335 = vsel %vm264, %v332, %v334
      %338 = vst [vmem:[#allocation2 + $0x30] sm:$0xf] %v335
      %vm339 = vcmask 920576
      %340 = vst.msk [vmem:[#allocation2 + $0x38] sm:$0xf] %vm339, %v334
      %341 = vrot.lane.b32.xlu0 %v246, 112
      %v342 = vpop.permute.xlu0 %341
      %343 = vrot.lane.b32.xlu0 %v221, 112
      %v344 = vpop.permute.xlu0 %343
      %vm345 = vcmask 916480
      %v346 = vsel %vm345, %v342, %v344
      %349 = vst [vmem:[#allocation2 + $0x30] sm:$0xf0] %v346
      %vm350 = vcmask 916484
      %351 = vst.msk [vmem:[#allocation2 + $0x38] sm:$0xf0] %vm350, %v344
      %352 = vrot.lane.b32.xlu0 %v260, 17
      %v353 = vpop.permute.xlu0 %352
      %v354 = vrot.slane %v353, 4
      %v355 = vsel %vm238, %v354, %v353
      %v357 = vmul.f32 %v221, %v355
      %v359 = vcombine.high %v357, %v357
      %360 = vrot.lane.b32.xlu0 %v357, 111
      %v361 = vpop.permute.xlu0 %360
      %362 = vrot.lane.b32.xlu0 %v359, 111
      %v363 = vpop.permute.xlu0 %362
      %v364 = vsel %vm228, %v361, %v363
      %367 = vst [vmem:[#allocation2 + $0x40] sm:$0xf] %v364
      %vm368 = vcmask 904192
      %369 = vst.msk [vmem:[#allocation2 + $0x48] sm:$0xf] %vm368, %v363
      %v370 = vld [vmem:[%s1] sm:$0x3]
      %v371 = vld [vmem:[#allocation2] sm:$0xff]
      %v372 = vld [vmem:[#allocation2 + $0x8] sm:$0xff]
      %v373 = vld [vmem:[#allocation2 + $0x10] sm:$0xff]
      %v374 = vld [vmem:[#allocation2 + $0x18] sm:$0xff]
      %v375 = vld [vmem:[#allocation2 + $0x20] sm:$0xff]
      %v376 = vld [vmem:[#allocation2 + $0x28] sm:$0xff]
      %v377 = vld [vmem:[#allocation2 + $0x30] sm:$0xff]
      %v378 = vld [vmem:[#allocation2 + $0x38] sm:$0xff]
      %v379 = vld [vmem:[#allocation2 + $0x40] sm:$0xf]
      %v380 = vld [vmem:[#allocation2 + $0x48] sm:$0xf]
      %v381 = vpack.c.bf16 %v373, %v371
      %v382 = vpack.c.bf16 %v374, %v372
      %v383 = vpack.c.bf16 %v377, %v375
      %v384 = vpack.c.bf16 %v378, %v376
      %v385 = vpack.c.bf16 %v379, %v379
      %v386 = vpack.c.bf16 %v380, %v380
      %v387 = vld [vmem:[%s2] sm:$0xf]
      %389 = vset.pattern.permute.xlu0 0
      %390 = vperm.xlu0 %389, %v387
      %v391 = vpop.permute.xlu0 %390
      %vm393 = vcmask 293888
      %v395 = vsel %vm393, %v370, 0
      %vm397 = vcmask 1041408
      %v399 = vsel %vm397, %v385, 0
      %v402 = vsel %vm397, %v386, 0
      %404 = vmatprep.subr.bf16.mxu0 %v382
      %405 = vmatpush1.bf16.msra.mxu0 %v381
      %406 = vmatprep.subr.bf16.mxu0 %v384
      %407 = vmatpush1.bf16.msra.mxu0 %v383
      %408 = vmatprep.subr.bf16.mxu0 %v402
      %409 = vmatpush1.bf16.msra.mxu0 %v399
      %410 = vmatprep.subr.bf16.mxu0 0
      %411 = vmatpush1.bf16.msra.mxu0 0
      %412 = vmatprep.subr.bf16.mxu0 0
      %413 = vmatpush1.bf16.msra.mxu0 0
      %414 = vmatprep.subr.bf16.mxu0 0
      %415 = vmatpush1.bf16.msra.mxu0 0
      %416 = vmatprep.subr.bf16.mxu0 0
      %417 = vmatpush1.bf16.msra.mxu0 0
      %418 = vmatprep.subr.bf16.mxu0 0
      %419 = vmatpush1.bf16.msra.mxu0 0
      %420 = vmatprep.subr.bf16.mxu0 0
      %421 = vmatpush1.bf16.msra.mxu0 0
      %422 = vmatprep.subr.bf16.mxu0 0
      %423 = vmatpush1.bf16.msra.mxu0 0
      %424 = vmatprep.subr.bf16.mxu0 0
      %425 = vmatpush1.bf16.msra.mxu0 0
      %426 = vmatprep.subr.bf16.mxu0 0
      %427 = vmatpush1.bf16.msra.mxu0 0
      %428 = vmatprep.subr.bf16.mxu0 0
      %429 = vmatpush1.bf16.msra.mxu0 0
      %430 = vmatprep.subr.bf16.mxu0 0
      %431 = vmatpush1.bf16.msra.mxu0 0
      %432 = vmatprep.subr.bf16.mxu0 0
      %433 = vmatpush1.bf16.msra.mxu0 0
      %434 = vmatprep.subr.bf16.mxu0 0
      %435 = vmatpush1.bf16.msra.mxu0 0
      %436 = vmatprep.mubr.bf16.mxu0 0
      %437 = vmatmul.mubr.bf16.gmra.mrb[0].mxu0 %v395
      %v438 = vpop.f32.mrb[0].mxu0
      %v439 = vadd.f32 %v391, %v438
      %v440 = vpop.f32.mrb[0].mxu0
      %v441 = vadd.f32 %v391, %v440
      %v442 = vpop.f32.mrb[0].mxu0
      %v443 = vpop.f32.mrb[0].mxu0
      %444 = vdwg.mxu0
      %v445 = vmax.f32 %v439, 0.0
      %v446 = vmax.f32 %v441, 0.0
      %447 = vrot.lane.b32.xlu0 %v213, 111
      %v448 = vpop.permute.xlu0 %447
      %449 = vrot.lane.b32.xlu0 %v214, 111
      %v450 = vpop.permute.xlu0 %449
      %v451 = vsel %vm228, %v448, %v450
      %v454 = vmul.f32 %v445, %v451
      %v455 = vmul.f32 %v446, %v450
      %458 = vrot.lane.b32.xlu0 %v454, 17
      %v459 = vpop.permute.xlu0 %458
      %460 = vrot.lane.b32.xlu0 %v455, 17
      %v461 = vpop.permute.xlu0 %460
      %v462 = vsel %vm238, %v459, %v461
      %465 = vst.msk [vmem:[#allocation2] sm:$0xf] %vm242, %v459
      %466 = vst [vmem:[#allocation2 + $0x8] sm:$0xf] %v462
      %v469 = vrot.slane %v445, 4
      %v470 = vrot.slane %v446, 4
      %471 = vrot.lane.b32.xlu0 %v469, 16
      %v472 = vpop.permute.xlu0 %471
      %473 = vrot.lane.b32.xlu0 %v470, 16
      %v474 = vpop.permute.xlu0 %473
      %v475 = vsel %vm251, %v472, %v474
      %478 = vst.msk [vmem:[#allocation2] sm:$0xf0] %vm255, %v472
      %479 = vst [vmem:[#allocation2 + $0x8] sm:$0xf0] %v475
      %480 = vrot.lane.b32.xlu0 %v219, 113
      %v481 = vpop.permute.xlu0 %480
      %482 = vrot.lane.b32.xlu0 %v220, 113
      %v483 = vpop.permute.xlu0 %482
      %v484 = vsel %vm264, %v481, %v483
      %v487 = vmul.f32 %v445, %v484
      %v488 = vmul.f32 %v446, %v483
      %491 = vrot.lane.b32.xlu0 %v487, 15
      %v492 = vpop.permute.xlu0 %491
      %493 = vrot.lane.b32.xlu0 %v488, 15
      %v494 = vpop.permute.xlu0 %493
      %v495 = vsel %vm274, %v492, %v494
      %498 = vst.msk [vmem:[#allocation2 + $0x10] sm:$0xf] %vm278, %v492
      %499 = vst [vmem:[#allocation2 + $0x18] sm:$0xf] %v495
      %500 = vrot.lane.b32.xlu0 %v213, 127
      %v501 = vpop.permute.xlu0 %500
      %502 = vrot.lane.b32.xlu0 %v214, 127
      %v503 = vpop.permute.xlu0 %502
      %v504 = vsel %vm284, %v501, %v503
      %v507 = vmul.f32 %v445, %v504
      %v508 = vmul.f32 %v446, %v503
      %v511 = vrot.slane %v507, 4
      %v512 = vrot.slane %v508, 4
      %513 = vrot.lane.b32.xlu0 %v511, 1
      %v514 = vpop.permute.xlu0 %513
      %515 = vrot.lane.b32.xlu0 %v512, 1
      %v516 = vpop.permute.xlu0 %515
      %v517 = vsel %vm294, %v514, %v516
      %520 = vst.msk [vmem:[#allocation2 + $0x10] sm:$0xf0] %vm298, %v514
      %521 = vst [vmem:[#allocation2 + $0x18] sm:$0xf0] %v517
      %522 = vst [vmem:[#allocation2 + $0x20] sm:$0xf] %v445
      %523 = vst [vmem:[#allocation2 + $0x28] sm:$0xf] %v446
      %524 = vrot.lane.b32.xlu0 %v219, 1
      %v525 = vpop.permute.xlu0 %524
      %526 = vrot.lane.b32.xlu0 %v220, 1
      %v527 = vpop.permute.xlu0 %526
      %v528 = vsel %vm294, %v525, %v527
      %v531 = vmul.f32 %v445, %v525
      %v532 = vmul.f32 %v446, %v528
      %v535 = vrot.slane %v531, 4
      %v536 = vrot.slane %v532, 4
      %537 = vrot.lane.b32.xlu0 %v535, 127
      %v538 = vpop.permute.xlu0 %537
      %539 = vrot.lane.b32.xlu0 %v536, 127
      %v540 = vpop.permute.xlu0 %539
      %v541 = vsel %vm284, %v538, %v540
      %544 = vst [vmem:[#allocation2 + $0x20] sm:$0xf0] %v541
      %545 = vst.msk [vmem:[#allocation2 + $0x28] sm:$0xf0] %vm321, %v540
      %546 = vrot.lane.b32.xlu0 %v213, 15
      %v547 = vpop.permute.xlu0 %546
      %548 = vrot.lane.b32.xlu0 %v214, 15
      %v549 = vpop.permute.xlu0 %548
      %v550 = vsel %vm274, %v547, %v549
      %v553 = vmul.f32 %v445, %v547
      %v554 = vmul.f32 %v446, %v550
      %557 = vrot.lane.b32.xlu0 %v553, 113
      %v558 = vpop.permute.xlu0 %557
      %559 = vrot.lane.b32.xlu0 %v554, 113
      %v560 = vpop.permute.xlu0 %559
      %v561 = vsel %vm264, %v558, %v560
      %564 = vst [vmem:[#allocation2 + $0x30] sm:$0xf] %v561
      %565 = vst.msk [vmem:[#allocation2 + $0x38] sm:$0xf] %vm339, %v560
      %566 = vrot.lane.b32.xlu0 %v469, 112
      %v567 = vpop.permute.xlu0 %566
      %568 = vrot.lane.b32.xlu0 %v470, 112
      %v569 = vpop.permute.xlu0 %568
      %v570 = vsel %vm345, %v567, %v569
      %573 = vst [vmem:[#allocation2 + $0x30] sm:$0xf0] %v570
      %574 = vst.msk [vmem:[#allocation2 + $0x38] sm:$0xf0] %vm350, %v569
      %575 = vrot.lane.b32.xlu0 %v219, 17
      %v576 = vpop.permute.xlu0 %575
      %577 = vrot.lane.b32.xlu0 %v220, 17
      %v578 = vpop.permute.xlu0 %577
      %v579 = vsel %vm238, %v576, %v578
      %v582 = vmul.f32 %v445, %v576
      %v583 = vmul.f32 %v446, %v579
      %586 = vrot.lane.b32.xlu0 %v582, 111
      %v587 = vpop.permute.xlu0 %586
      %588 = vrot.lane.b32.xlu0 %v583, 111
      %v589 = vpop.permute.xlu0 %588
      %v590 = vsel %vm228, %v587, %v589
      %593 = vst [vmem:[#allocation2 + $0x40] sm:$0xf] %v590
      %594 = vst.msk [vmem:[#allocation2 + $0x48] sm:$0xf] %vm368, %v589
      %s595 = scalar_lea.vmem %s1, 2
      %v596 = vld [vmem:[%s595] sm:$0x3]
      %v597 = vld [vmem:[#allocation2] sm:$0xff]
      %v598 = vld [vmem:[#allocation2 + $0x8] sm:$0xff]
      %v599 = vld [vmem:[#allocation2 + $0x10] sm:$0xff]
      %v600 = vld [vmem:[#allocation2 + $0x18] sm:$0xff]
      %v601 = vld [vmem:[#allocation2 + $0x20] sm:$0xff]
      %v602 = vld [vmem:[#allocation2 + $0x28] sm:$0xff]
      %v603 = vld [vmem:[#allocation2 + $0x30] sm:$0xff]
      %v604 = vld [vmem:[#allocation2 + $0x38] sm:$0xff]
      %v605 = vld [vmem:[#allocation2 + $0x40] sm:$0xf]
      %v606 = vld [vmem:[#allocation2 + $0x48] sm:$0xf]
      %v607 = vpack.c.bf16 %v599, %v597
      %v608 = vpack.c.bf16 %v600, %v598
      %v609 = vpack.c.bf16 %v603, %v601
      %v610 = vpack.c.bf16 %v604, %v602
      %v611 = vpack.c.bf16 %v605, %v605
      %v612 = vpack.c.bf16 %v606, %v606
      %s613 = scalar_lea.vmem %s2, 4
      %v614 = vld [vmem:[%s613] sm:$0xf]
      %616 = vset.pattern.permute.xlu0 0
      %617 = vperm.xlu0 %616, %v614
      %v618 = vpop.permute.xlu0 %617
      %v621 = vsel %vm393, %v596, 0
      %v624 = vsel %vm397, %v611, 0
      %v627 = vsel %vm397, %v612, 0
      %629 = vmatprep.subr.bf16.mxu0 %v608
      %630 = vmatpush1.bf16.msra.mxu0 %v607
      %631 = vmatprep.subr.bf16.mxu0 %v610
      %632 = vmatpush1.bf16.msra.mxu0 %v609
      %633 = vmatprep.subr.bf16.mxu0 %v627
      %634 = vmatpush1.bf16.msra.mxu0 %v624
      %635 = vmatprep.subr.bf16.mxu0 0
      %636 = vmatpush1.bf16.msra.mxu0 0
      %637 = vmatprep.subr.bf16.mxu0 0
      %638 = vmatpush1.bf16.msra.mxu0 0
      %639 = vmatprep.subr.bf16.mxu0 0
      %640 = vmatpush1.bf16.msra.mxu0 0
      %641 = vmatprep.subr.bf16.mxu0 0
      %642 = vmatpush1.bf16.msra.mxu0 0
      %643 = vmatprep.subr.bf16.mxu0 0
      %644 = vmatpush1.bf16.msra.mxu0 0
      %645 = vmatprep.subr.bf16.mxu0 0
      %646 = vmatpush1.bf16.msra.mxu0 0
      %647 = vmatprep.subr.bf16.mxu0 0
      %648 = vmatpush1.bf16.msra.mxu0 0
      %649 = vmatprep.subr.bf16.mxu0 0
      %650 = vmatpush1.bf16.msra.mxu0 0
      %651 = vmatprep.subr.bf16.mxu0 0
      %652 = vmatpush1.bf16.msra.mxu0 0
      %653 = vmatprep.subr.bf16.mxu0 0
      %654 = vmatpush1.bf16.msra.mxu0 0
      %655 = vmatprep.subr.bf16.mxu0 0
      %656 = vmatpush1.bf16.msra.mxu0 0
      %657 = vmatprep.subr.bf16.mxu0 0
      %658 = vmatpush1.bf16.msra.mxu0 0
      %659 = vmatprep.subr.bf16.mxu0 0
      %660 = vmatpush1.bf16.msra.mxu0 0
      %661 = vmatprep.mubr.bf16.mxu0 0
      %662 = vmatmul.mubr.bf16.gmra.mrb[0].mxu0 %v621
      %v663 = vpop.f32.mrb[0].mxu0
      %v664 = vadd.f32 %v618, %v663
      %v665 = vpop.f32.mrb[0].mxu0
      %v666 = vadd.f32 %v618, %v665
      %v667 = vpop.f32.mrb[0].mxu0
      %v668 = vpop.f32.mrb[0].mxu0
      %669 = vdwg.mxu0
      %v670 = vmax.f32 %v664, 0.0
      %v671 = vmax.f32 %v666, 0.0
      %v672 = vmul.f32 %v670, %v451
      %v673 = vmul.f32 %v671, %v450
      %676 = vrot.lane.b32.xlu0 %v672, 17
      %v677 = vpop.permute.xlu0 %676
      %678 = vrot.lane.b32.xlu0 %v673, 17
      %v679 = vpop.permute.xlu0 %678
      %v680 = vsel %vm238, %v677, %v679
      %683 = vst.msk [vmem:[#allocation2] sm:$0xf] %vm242, %v677
      %684 = vst [vmem:[#allocation2 + $0x8] sm:$0xf] %v680
      %v687 = vrot.slane %v670, 4
      %v688 = vrot.slane %v671, 4
      %689 = vrot.lane.b32.xlu0 %v687, 16
      %v690 = vpop.permute.xlu0 %689
      %691 = vrot.lane.b32.xlu0 %v688, 16
      %v692 = vpop.permute.xlu0 %691
      %v693 = vsel %vm251, %v690, %v692
      %696 = vst.msk [vmem:[#allocation2] sm:$0xf0] %vm255, %v690
      %697 = vst [vmem:[#allocation2 + $0x8] sm:$0xf0] %v693
      %v698 = vmul.f32 %v670, %v484
      %v699 = vmul.f32 %v671, %v483
      %702 = vrot.lane.b32.xlu0 %v698, 15
      %v703 = vpop.permute.xlu0 %702
      %704 = vrot.lane.b32.xlu0 %v699, 15
      %v705 = vpop.permute.xlu0 %704
      %v706 = vsel %vm274, %v703, %v705
      %709 = vst.msk [vmem:[#allocation2 + $0x10] sm:$0xf] %vm278, %v703
      %710 = vst [vmem:[#allocation2 + $0x18] sm:$0xf] %v706
      %v711 = vmul.f32 %v670, %v504
      %v712 = vmul.f32 %v671, %v503
      %v715 = vrot.slane %v711, 4
      %v716 = vrot.slane %v712, 4
      %717 = vrot.lane.b32.xlu0 %v715, 1
      %v718 = vpop.permute.xlu0 %717
      %719 = vrot.lane.b32.xlu0 %v716, 1
      %v720 = vpop.permute.xlu0 %719
      %v721 = vsel %vm294, %v718, %v720
      %724 = vst.msk [vmem:[#allocation2 + $0x10] sm:$0xf0] %vm298, %v718
      %725 = vst [vmem:[#allocation2 + $0x18] sm:$0xf0] %v721
      %726 = vst [vmem:[#allocation2 + $0x20] sm:$0xf] %v670
      %727 = vst [vmem:[#allocation2 + $0x28] sm:$0xf] %v671
      %v728 = vmul.f32 %v670, %v525
      %v729 = vmul.f32 %v671, %v528
      %v732 = vrot.slane %v728, 4
      %v733 = vrot.slane %v729, 4
      %734 = vrot.lane.b32.xlu0 %v732, 127
      %v735 = vpop.permute.xlu0 %734
      %736 = vrot.lane.b32.xlu0 %v733, 127
      %v737 = vpop.permute.xlu0 %736
      %v738 = vsel %vm284, %v735, %v737
      %741 = vst [vmem:[#allocation2 + $0x20] sm:$0xf0] %v738
      %742 = vst.msk [vmem:[#allocation2 + $0x28] sm:$0xf0] %vm321, %v737
      %v743 = vmul.f32 %v670, %v547
      %v744 = vmul.f32 %v671, %v550
      %747 = vrot.lane.b32.xlu0 %v743, 113
      %v748 = vpop.permute.xlu0 %747
      %749 = vrot.lane.b32.xlu0 %v744, 113
      %v750 = vpop.permute.xlu0 %749
      %v751 = vsel %vm264, %v748, %v750
      %754 = vst [vmem:[#allocation2 + $0x30] sm:$0xf] %v751
      %755 = vst.msk [vmem:[#allocation2 + $0x38] sm:$0xf] %vm339, %v750
      %756 = vrot.lane.b32.xlu0 %v687, 112
      %v757 = vpop.permute.xlu0 %756
      %758 = vrot.lane.b32.xlu0 %v688, 112
      %v759 = vpop.permute.xlu0 %758
      %v760 = vsel %vm345, %v757, %v759
      %763 = vst [vmem:[#allocation2 + $0x30] sm:$0xf0] %v760
      %764 = vst.msk [vmem:[#allocation2 + $0x38] sm:$0xf0] %vm350, %v759
      %v765 = vmul.f32 %v670, %v576
      %v766 = vmul.f32 %v671, %v579
      %769 = vrot.lane.b32.xlu0 %v765, 111
      %v770 = vpop.permute.xlu0 %769
      %771 = vrot.lane.b32.xlu0 %v766, 111
      %v772 = vpop.permute.xlu0 %771
      %v773 = vsel %vm228, %v770, %v772
      %776 = vst [vmem:[#allocation2 + $0x40] sm:$0xf] %v773
      %777 = vst.msk [vmem:[#allocation2 + $0x48] sm:$0xf] %vm368, %v772
      %s778 = scalar_lea.vmem %s1, 4
      %v779 = vld [vmem:[%s778] sm:$0x3]
      %v780 = vld [vmem:[#allocation2] sm:$0xff]
      %v781 = vld [vmem:[#allocation2 + $0x8] sm:$0xff]
      %v782 = vld [vmem:[#allocation2 + $0x10] sm:$0xff]
      %v783 = vld [vmem:[#allocation2 + $0x18] sm:$0xff]
      %v784 = vld [vmem:[#allocation2 + $0x20] sm:$0xff]
      %v785 = vld [vmem:[#allocation2 + $0x28] sm:$0xff]
      %v786 = vld [vmem:[#allocation2 + $0x30] sm:$0xff]
      %v787 = vld [vmem:[#allocation2 + $0x38] sm:$0xff]
      %v788 = vld [vmem:[#allocation2 + $0x40] sm:$0xf]
      %v789 = vld [vmem:[#allocation2 + $0x48] sm:$0xf]
      %v790 = vpack.c.bf16 %v782, %v780
      %v791 = vpack.c.bf16 %v783, %v781
      %v792 = vpack.c.bf16 %v786, %v784
      %v793 = vpack.c.bf16 %v787, %v785
      %v794 = vpack.c.bf16 %v788, %v788
      %v795 = vpack.c.bf16 %v789, %v789
      %s796 = scalar_lea.vmem %s2, 8
      %v797 = vld [vmem:[%s796] sm:$0xf]
      %799 = vset.pattern.permute.xlu0 0
      %800 = vperm.xlu0 %799, %v797
      %v801 = vpop.permute.xlu0 %800
      %v804 = vsel %vm393, %v779, 0
      %v807 = vsel %vm397, %v794, 0
      %v810 = vsel %vm397, %v795, 0
      %812 = vmatprep.subr.bf16.mxu0 %v791
      %813 = vmatpush1.bf16.msra.mxu0 %v790
      %814 = vmatprep.subr.bf16.mxu0 %v793
      %815 = vmatpush1.bf16.msra.mxu0 %v792
      %816 = vmatprep.subr.bf16.mxu0 %v810
      %817 = vmatpush1.bf16.msra.mxu0 %v807
      %818 = vmatprep.subr.bf16.mxu0 0
      %819 = vmatpush1.bf16.msra.mxu0 0
      %820 = vmatprep.subr.bf16.mxu0 0
      %821 = vmatpush1.bf16.msra.mxu0 0
      %822 = vmatprep.subr.bf16.mxu0 0
      %823 = vmatpush1.bf16.msra.mxu0 0
      %824 = vmatprep.subr.bf16.mxu0 0
      %825 = vmatpush1.bf16.msra.mxu0 0
      %826 = vmatprep.subr.bf16.mxu0 0
      %827 = vmatpush1.bf16.msra.mxu0 0
      %828 = vmatprep.subr.bf16.mxu0 0
      %829 = vmatpush1.bf16.msra.mxu0 0
      %830 = vmatprep.subr.bf16.mxu0 0
      %831 = vmatpush1.bf16.msra.mxu0 0
      %832 = vmatprep.subr.bf16.mxu0 0
      %833 = vmatpush1.bf16.msra.mxu0 0
      %834 = vmatprep.subr.bf16.mxu0 0
      %835 = vmatpush1.bf16.msra.mxu0 0
      %836 = vmatprep.subr.bf16.mxu0 0
      %837 = vmatpush1.bf16.msra.mxu0 0
      %838 = vmatprep.subr.bf16.mxu0 0
      %839 = vmatpush1.bf16.msra.mxu0 0
      %840 = vmatprep.subr.bf16.mxu0 0
      %841 = vmatpush1.bf16.msra.mxu0 0
      %842 = vmatprep.subr.bf16.mxu0 0
      %843 = vmatpush1.bf16.msra.mxu0 0
      %844 = vmatprep.mubr.bf16.mxu0 0
      %845 = vmatmul.mubr.bf16.gmra.mrb[0].mxu0 %v804
      %v846 = vpop.f32.mrb[0].mxu0
      %v847 = vadd.f32 %v801, %v846
      %v848 = vpop.f32.mrb[0].mxu0
      %v849 = vadd.f32 %v801, %v848
      %v850 = vpop.f32.mrb[0].mxu0
      %v851 = vpop.f32.mrb[0].mxu0
      %852 = vdwg.mxu0
      %v853 = vmax.f32 %v847, 0.0
      %v854 = vmax.f32 %v849, 0.0
      %v855 = vadd.f32 %v853, %v221
      %v856 = vadd.f32 %v854, %v301
      %v859 = vcombine.low %v855, %v856
      %861 = vst [vmem:[%s170] sm:$0xff] %v859
      %p862 = scmp.lt.s32.totalorder %s14, 1
      %s863 = scalar_select %p862, %s14, 1
      %s864 = smul.addr %s863, 2
      %s865 = smul.addr %s864, 4
      %s866 = scalar_lea.vmem %s3, %s865
      // Predicated region
      $region33: #{rlfb_forward.1} parent=31 // pred_check
        %p867 = pneg %p100
      $region34: #{rlfb_forward.1} parent=31 // pred_check_branch
        %869 = sbr.rel (%p867) target = $region36
      $region35: #{rlfb_forward.1} parent=31 // pred_region
        _
      $region36: #{rlfb_forward.1} parent=31 // pred_fallthru
        _
    $region32: #{rlfb_forward.1} parent=5 // pred_fallthru
      _
    %p870 = scmp.le.s32.totalorder 2, %s9
    // Predicated region
    $region37: #{rlfb_forward.1} parent=5 // pred_check
      %p871 = pneg %p870
    $region38: #{rlfb_forward.1} parent=5 // pred_check_branch
      %873 = sbr.rel (%p871) target = $region40
    $region39: #{rlfb_forward.1} parent=5 // pred_region
      %s874 = ssub.s32 %s9, 2
      // Predicated region
      $region41: #{rlfb_forward.1} parent=39 // pred_check
        %p875 = pneg %p106
      $region42: #{rlfb_forward.1} parent=39 // pred_check_branch
        %877 = sbr.rel (%p875) target = $region44
      $region43: #{rlfb_forward.1} parent=39 // pred_region
        %p878 = scmp.lt.s32.totalorder %s15, 1
        %s879 = scalar_select %p878, %s15, 1
        %s880 = smul.addr %s879, 2
        %s881 = smul.addr %s880, 4
        %s882 = scalar_lea.vmem %s3, %s881
      $region44: #{rlfb_forward.1} parent=39 // pred_fallthru
        _
    $region40: #{rlfb_forward.1} parent=5 // pred_fallthru
      _
  $region6: #{rlfb_forward.1} parent=0 // loop_footer
    %s13 = sadd.s32 1, %s9
  $region7: #{rlfb_forward.1} parent=0 // loop_footer_branch
    %8 = sbr.rel target = $region3
  $region8: #{rlfb_forward.1} parent=0 // loop_exit
    _

</llo_original>
